<compile_context>
chip_gen: v5e
topology: v5e:2x2
jax: 0.10.0
libtpu: 0.0.40
codegen_flags: <defaults>
</compile_context>

<pallas_src>
import math

import jax
import jax.numpy as jnp
import numpy as np
from jax.experimental import pallas as pl
from jax.experimental.pallas import tpu as pltpu

_LANES = 128           # vreg lane width -> lane-dense (unmasked) stores
_MAX_TILE_ROWS = 1024  # f32: 1024*128*4 B = 512 KiB/tile; x4 dbl-buffered ~2 MiB VMEM


def _identity_kernel(x_ref, o_ref):
    # Pure pass-through: copy the VMEM tile to the (aliased) output tile.
    o_ref[...] = x_ref[...]


def _identity_copy_impl(x: jax.Array) -> jax.Array:
    """Tiled, lane-dense identity copy through VMEM (output aliases input)."""
    orig_shape = x.shape
    total = int(math.prod(orig_shape)) if x.ndim > 0 else 1

    if total > 0 and total % _LANES == 0:
        # Lane-dense layout: last dim is a multiple of 128 lanes.
        rows, cols = total // _LANES, _LANES
        tm = rows if rows <= _MAX_TILE_ROWS else _MAX_TILE_ROWS  # multiple of 8
    else:
        # Odd sizes: single full-array block (exempt from the (8,128) rule
        # because block_shape == array shape).
        cols = orig_shape[-1] if (x.ndim >= 1 and orig_shape[-1] > 0) else 1
        rows = max(total // cols, 1)
        tm = rows

    x2d = x.reshape(rows, cols)
    grid = (pl.cdiv(rows, tm),)

    out2d = pl.pallas_call(
        _identity_kernel,
        out_shape=jax.ShapeDtypeStruct((rows, cols), x.dtype),
        grid=grid,
        in_specs=[pl.BlockSpec((tm, cols), lambda i: (i, 0))],
        out_specs=pl.BlockSpec((tm, cols), lambda i: (i, 0)),
        # Output reuses the input's HBM buffer: no extra allocation.
        input_output_aliases={0: 0},
        compiler_params=pltpu.CompilerParams(
            dimension_semantics=("parallel",),
        ),
    )(x2d)

    return out2d.reshape(orig_shape)


# Donate the input at the jit boundary so the aliased output can truly reuse
# the input's HBM buffer (otherwise XLA inserts a defensive copy).
_identity_copy = jax.jit(_identity_copy_impl, donate_argnums=0)


def print_shape_module(x: jax.Array, ext_str: str = "PrintShapeModule") -> jax.Array:
    """Forward of PrintShapeModule: print ext_str + input shape, return x unchanged."""
    # Equivalent of `print(self.ext_str, x.shape)` in the PyTorch module.
    print(ext_str, tuple(x.shape))
    return _identity_copy(x)


if __name__ == "__main__":
    key = jax.random.PRNGKey(0)
    x = jax.random.normal(key, (2, 4, 16, 16), dtype=jnp.float32)

    # Host snapshot for verification (x's device buffer is donated to the kernel).
    x_host = np.asarray(jax.device_get(x))

    y = print_shape_module(x, ext_str="PrintShapeModule")
    y = jax.block_until_ready(y)

    assert y.shape == (2, 4, 16, 16) and y.dtype == jnp.float32
    assert np.array_equal(np.asarray(y), x_host)
    print("KERNEL_OK")
</pallas_src>

<mosaic_0001>
module attributes {stable_mosaic.version = 11 : i64} {
  func.func @_identity_kernel(%arg0: i32, %arg1: memref<16x128xf32, #tpu.memory_space<vmem>>, %arg2: memref<16x128xf32, #tpu.memory_space<vmem>>) attributes {dimension_semantics = [#tpu.dimension_semantics<parallel>], iteration_bounds = array<i64: 1>, scalar_prefetch = 0 : i64, scratch_operands = 0 : i64, tpu.core_type = #tpu.core_type<tc>, window_params = [{transform_indices = @transform_0, window_bounds = array<i64: 16, 128>}, {transform_indices = @transform_1, window_bounds = array<i64: 16, 128>}]} {
    %c0 = arith.constant 0 : index
    %c0_0 = arith.constant 0 : index
    %0 = vector.load %arg1[%c0, %c0_0] : memref<16x128xf32, #tpu.memory_space<vmem>>, vector<16x128xf32>
    %c0_1 = arith.constant 0 : index
    %c0_2 = arith.constant 0 : index
    %1 = vector.load %arg2[%c0_1, %c0_2] : memref<16x128xf32, #tpu.memory_space<vmem>>, vector<16x128xf32>
    tpu.vector_store %arg2[%c0_1, %c0_2], %0 {strides = array<i32>} : memref<16x128xf32, #tpu.memory_space<vmem>>, vector<16x128xf32>,
    return
  }
  func.func @transform_0(%arg0: i32) -> (i32, i32) {
    %c0_i32 = arith.constant 0 : i32
    %c0_i32_0 = arith.constant 0 : i32
    return %arg0, %c0_i32 : i32, i32
  }
  func.func @transform_1(%arg0: i32) -> (i32, i32) {
    %c0_i32 = arith.constant 0 : i32
    %c0_i32_0 = arith.constant 0 : i32
    return %arg0, %c0_i32 : i32, i32
  }
}

</mosaic_0001>

<llo_original>
// kernel: _identity_copy_impl.1
$region0: #{_identity_copy_impl.1}
  #allocation0 [shape = 'u32[]', space=smem, size = 0x4, offset = 0x4, fixed_abs, tag = 'smem constant byte address 0x4 - core index']
  #allocation1 [shape = 'u32[72,128]{1,0:T(1,128)}', space=vmem, size = 0x9000, scoped, tag = 'internal scratch']
  %s0 = inlined_call_operand.vmem [shape: f32[16,128], index: 0, kind: input, shape index: {}, may-alias: {0,1}]
  %s1 = inlined_call_operand.vmem [shape: f32[16,128], index: 1, kind: output, shape index: {}, may-alias: {0,1}]
  %s2 = sld [smem:[#allocation0]]
  $region14: #{_identity_copy_impl.1} parent=0
    _
  %s4 = ssub.s32 1, %s2
  %s5 = scalar_select 0, %s4, %s2
  // Predicated region
  $region2: #{_identity_copy_impl.1} parent=0 // pred_check
    _
  $region3: #{_identity_copy_impl.1} parent=0 // pred_check_branch
    %7 = sbr.rel (0) target = $region5
  $region4: #{_identity_copy_impl.1} parent=0 // pred_region
    _
  $region5: #{_identity_copy_impl.1} parent=0 // pred_fallthru
    _
  %v8 = vld [vmem:[%s0] sm:$0xff]
  %v9 = vld [vmem:[%s0 + $0x8] sm:$0xff]
  %10 = vst [vmem:[%s1] sm:$0xff] %v8
  %11 = vst [vmem:[%s1 + $0x8] sm:$0xff] %v9
  // Predicated region
  $region6: #{_identity_copy_impl.1} parent=0 // pred_check
    _
  $region7: #{_identity_copy_impl.1} parent=0 // pred_check_branch
    %13 = sbr.rel (0) target = $region9
  $region8: #{_identity_copy_impl.1} parent=0 // pred_region
    _
  $region9: #{_identity_copy_impl.1} parent=0 // pred_fallthru
    _
  // Predicated region
  $region10: #{_identity_copy_impl.1} parent=0 // pred_check
    _
  $region11: #{_identity_copy_impl.1} parent=0 // pred_check_branch
    %15 = sbr.rel (0) target = $region13
  $region12: #{_identity_copy_impl.1} parent=0 // pred_region
    _
  $region13: #{_identity_copy_impl.1} parent=0 // pred_fallthru
    _

</llo_original>
